<compile_context>
chip_gen: v6e
topology: v6e:2x2x1
jax: 0.10.0
libtpu: 0.0.40
codegen_flags: <defaults>
</compile_context>

<pallas_src>
import functools

import jax
import jax.numpy as jnp
from jax.experimental import pallas as pl
from jax.experimental.pallas import tpu as pltpu


# ----------------------------------------------------------------------------
# VMEM budget: derive from the chip, keep headroom (safe on v5e/v6e/v7x).
# ----------------------------------------------------------------------------
def _vmem_budget_bytes():
    try:
        cap = int(pltpu.get_tpu_info().vmem_capacity_bytes)
    except Exception:            # no TPU info available -> assume v7x (64 MiB)
        cap = 64 << 20
    cap = min(max(cap, 32 << 20), 128 << 20)
    return max(cap - (16 << 20), 24 << 20)     # ~16 MiB headroom for the compiler


# ----------------------------------------------------------------------------
# kernels
# ----------------------------------------------------------------------------
def _fused_hfm_kernel(x_ref, rgb_ref, w1t_ref, b1_ref, w2t_ref, b2_ref,
                      out_ref, *, inv_hw):
    """Single-shot HFM: squeeze-mean -> MLP -> gate, everything VMEM resident.

    All MLP tensors are columns / block-diagonal matrices so no in-kernel
    relayout (lane<->sublane move) is needed:
        mean : (BC, 1)        w1t : (B*HID, BC)   b1 : (B*HID, 1)
        h    : (B*HID, 1)     w2t : (BC, B*HID)   b2 : (BC, 1)
        s    : (BC, 1)
    """
    rgbf = rgb_ref[...].astype(jnp.float32)
    mean = jnp.sum(rgbf, axis=1, keepdims=True) * inv_hw                 # (BC, 1)
    h = jnp.dot(w1t_ref[...], mean, preferred_element_type=jnp.float32)
    h = jnp.maximum(h + b1_ref[...], 0.0)                                # (B*HID, 1)
    z = jnp.dot(w2t_ref[...], h, preferred_element_type=jnp.float32) + b2_ref[...]
    s = 1.0 / (1.0 + jnp.exp(-z))                                        # sigmoid, (BC, 1)
    out_ref[...] = (x_ref[...].astype(jnp.float32) * s + rgbf).astype(out_ref.dtype)


def _squeeze_sum_kernel(rgb_ref, sum_ref):
    """Accumulate per-row spatial sums across HW tiles (reduction axis last)."""
    @pl.when(pl.program_id(1) == 0)
    def _():
        sum_ref[...] = jnp.zeros_like(sum_ref)

    sum_ref[...] += jnp.sum(rgb_ref[...].astype(jnp.float32), axis=1, keepdims=True)


def _gate_kernel(s_ref, x_ref, rgb_ref, out_ref):
    """out = x * s + rgb   (s broadcast along the lane / HW axis)."""
    xf = x_ref[...].astype(jnp.float32)
    rf = rgb_ref[...].astype(jnp.float32)
    out_ref[...] = (xf * s_ref[...] + rf).astype(out_ref.dtype)


# ----------------------------------------------------------------------------
# wrapper helpers
# ----------------------------------------------------------------------------
def _block_diag(w, n):
    """(m, k) -> (n*m, n*k) block-diagonal replication of w."""
    if n == 1:
        return w
    m, k = w.shape
    eye = jnp.eye(n, dtype=w.dtype)
    return (eye[:, None, :, None] * w[None, :, None, :]).reshape(n * m, n * k)


def _pick_fold(bc, hw):
    """Fold a factor of HW into the row axis so the sublane dim holds >= 8 rows."""
    if bc >= 8:
        return 1
    for k in (8, 4, 2):
        if bc * k >= 8 and hw % k == 0:
            return k
    return 1


def _pick_rows(bc, max_rows):
    """Largest multiple-of-8 divisor of bc within the row budget; prefers >= 2
    BC blocks (parallel axis -> megacore / v7x dual-TC sharding)."""
    cap = min(bc, max(max_rows, 8))
    if bc >= 16 and bc % 16 == 0:
        cap = min(cap, bc // 2)
    start = cap - (cap % 8)
    for r in range(start, 7, -8):
        if bc % r == 0:
            return r
    return bc                     # full extent is always a legal block size


def _pick_tile(hw, cap):
    """Largest 128-multiple divisor of hw with at most `cap` elements per row."""
    if hw <= cap:
        return hw
    divs = [d for d in range(128, hw + 1, 128) if hw % d == 0]
    fit = [d for d in divs if d <= cap]
    if fit:
        return max(fit)
    if divs:                      # nothing fits the budget: smallest legal tile
        return min(divs)
    return hw                     # no 128-multiple divisor: single full-width block


def _excite(squeeze, w1, b1, w2, b2):
    """Excitation MLP (used by the streaming path and the reference)."""
    h = jnp.maximum(jnp.dot(squeeze, w1, precision="highest") + b1, 0.0)
    return jax.nn.sigmoid(jnp.dot(h, w2, precision="highest") + b2)


# ----------------------------------------------------------------------------
# forward
# ----------------------------------------------------------------------------
def hfm_forward(input_tensor, rgb, w1, b1, w2, b2, *, force_two_pass=False):
    """out = x * sigmoid(fc2(relu(fc1(mean_hw(rgb))))) + rgb, x/rgb: (B,C,H,W)."""
    B, C, H, W = input_tensor.shape
    HW, BC = H * W, B * C
    HID = w1.shape[1]
    budget = _vmem_budget_bytes()
    itemsize = jnp.dtype(input_tensor.dtype).itemsize

    x2 = input_tensor.reshape(BC, HW)
    rgb2 = rgb.reshape(BC, HW)

    # --------------------------------------------------------------------- #
    # Path F: fully fused single kernel when everything fits in VMEM.        #
    # --------------------------------------------------------------------- #
    blkdiag_bytes = 2 * (B * HID) * BC * 4
    resident_bytes = (2 * 3 * BC * HW * max(itemsize, 4)     # x, rgb, out (x2 bufs)
                      + 2 * blkdiag_bytes + (4 << 20))       # weights + margin
    if (not force_two_pass and resident_bytes <= budget
            and blkdiag_bytes <= (8 << 20)):
        w1t = _block_diag(w1.astype(jnp.float32).T, B)       # (B*HID, BC)
        w2t = _block_diag(w2.astype(jnp.float32).T, B)       # (BC, B*HID)
        b1c = jnp.tile(b1.astype(jnp.float32), B).reshape(B * HID, 1)
        b2c = jnp.tile(b2.astype(jnp.float32), B).reshape(BC, 1)

        out2 = pl.pallas_call(
            functools.partial(_fused_hfm_kernel, inv_hw=1.0 / HW),
            out_shape=jax.ShapeDtypeStruct((BC, HW), input_tensor.dtype),
            grid=(1,),
            in_specs=[
                pl.BlockSpec((BC, HW), lambda i: (0, 0)),       # x
                pl.BlockSpec((BC, HW), lambda i: (0, 0)),       # rgb
                pl.BlockSpec((B * HID, BC), lambda i: (0, 0)),  # block-diag w1.T
                pl.BlockSpec((B * HID, 1), lambda i: (0, 0)),   # b1 column
                pl.BlockSpec((BC, B * HID), lambda i: (0, 0)),  # block-diag w2.T
                pl.BlockSpec((BC, 1), lambda i: (0, 0)),        # b2 column
            ],
            out_specs=pl.BlockSpec((BC, HW), lambda i: (0, 0)),
            compiler_params=pltpu.CompilerParams(
                dimension_semantics=("arbitrary",),
                vmem_limit_bytes=budget),
            cost_estimate=pl.CostEstimate(
                flops=3 * BC * HW + 4 * B * C * HID,
                transcendentals=BC,
                bytes_accessed=3 * BC * HW * itemsize + 2 * blkdiag_bytes),
        )(x2, rgb2, w1t, b1c, w2t, b2c)
        return out2.reshape(B, C, H, W)

    # --------------------------------------------------------------------- #
    # Path S: two streaming passes for tensors too large for VMEM.           #
    # --------------------------------------------------------------------- #
    fold = _pick_fold(BC, HW)                 # fill sublanes when BC < 8
    BCe, HWe = BC * fold, HW // fold
    x2e = x2.reshape(BCe, HWe)
    rgb2e = rgb2.reshape(BCe, HWe)

    # per-block element budget: gate pass streams 3 arrays x 2 pipeline buffers
    per_block = max(min((budget - (4 << 20)) // (6 * 4), 2 * 1024 * 1024), 8 * 128)
    bc_blk = _pick_rows(BCe, per_block // 128)
    tile = _pick_tile(HWe, max(per_block // bc_blk, 128))
    bc_blocks, hw_blocks = BCe // bc_blk, HWe // tile

    # ---- pass 1: per-row spatial sums (BC parallel, HW reduction last) ----
    row_sums = pl.pallas_call(
        _squeeze_sum_kernel,
        out_shape=jax.ShapeDtypeStruct((BCe, 1), jnp.float32),
        grid=(bc_blocks, hw_blocks),
        in_specs=[pl.BlockSpec((bc_blk, tile), lambda b, t: (b, t))],
        out_specs=pl.BlockSpec((bc_blk, 1), lambda b, t: (b, 0)),
        compiler_params=pltpu.CompilerParams(
            dimension_semantics=("parallel", "arbitrary"),
            vmem_limit_bytes=budget),
        cost_estimate=pl.CostEstimate(
            flops=BCe * HWe, transcendentals=0,
            bytes_accessed=BCe * HWe * itemsize + BCe * 4),
    )(rgb2e)

    # Tiny excitation MLP in plain JAX: on this (large-tensor) path the two
    # streaming passes dominate, so a third fused kernel variant isn't worth it.
    squeeze = row_sums.reshape(BC, fold).sum(axis=1).reshape(B, C) * (1.0 / HW)
    s = _excite(squeeze, w1, b1, w2, b2)
    s_col = jnp.repeat(s.reshape(BC, 1), fold, axis=0).astype(jnp.float32)

    # ---- pass 2: streaming gate  out = x * s + rgb  (both axes parallel) ---
    out2 = pl.pallas_call(
        _gate_kernel,
        out_shape=jax.ShapeDtypeStruct((BCe, HWe), input_tensor.dtype),
        grid=(bc_blocks, hw_blocks),
        in_specs=[
            pl.BlockSpec((bc_blk, 1), lambda b, t: (b, 0)),      # s (per-row scale)
            pl.BlockSpec((bc_blk, tile), lambda b, t: (b, t)),   # x
            pl.BlockSpec((bc_blk, tile), lambda b, t: (b, t)),   # rgb
        ],
        out_specs=pl.BlockSpec((bc_blk, tile), lambda b, t: (b, t)),
        compiler_params=pltpu.CompilerParams(
            dimension_semantics=("parallel", "parallel"),
            vmem_limit_bytes=budget),
        cost_estimate=pl.CostEstimate(
            flops=2 * BCe * HWe, transcendentals=0,
            bytes_accessed=3 * BCe * HWe * itemsize + BCe * 4),
    )(s_col, x2e, rgb2e)
    return out2.reshape(B, C, H, W)


# ----------------------------------------------------------------------------
# pure-JAX reference (matches the PyTorch forward exactly)
# ----------------------------------------------------------------------------
def hfm_reference(input_tensor, rgb, w1, b1, w2, b2):
    B, C, H, W = input_tensor.shape
    squeeze = rgb.reshape(B, C, -1).mean(axis=2)
    s = _excite(squeeze, w1, b1, w2, b2)
    return input_tensor * s[:, :, None, None] + rgb


if __name__ == "__main__":
    # Shapes consistent with the module: B=2, C=4, H=W=16, hidden hard-coded 128.
    B, C, H, W = 2, 4, 16, 16
    HIDDEN = 128

    key = jax.random.PRNGKey(0)
    kx, kr, kw1, kb1, kw2, kb2 = jax.random.split(key, 6)

    x = jax.random.normal(kx, (B, C, H, W), dtype=jnp.float32)
    rgb = jax.random.normal(kr, (B, C, H, W), dtype=jnp.float32)

    # PyTorch Linear weights stored pre-transposed so the math is x @ W.
    w1 = 0.1 * jax.random.normal(kw1, (C, HIDDEN), dtype=jnp.float32)
    b1 = 0.1 * jax.random.normal(kb1, (HIDDEN,), dtype=jnp.float32)
    w2 = 0.1 * jax.random.normal(kw2, (HIDDEN, C), dtype=jnp.float32)
    b2 = 0.1 * jax.random.normal(kb2, (C,), dtype=jnp.float32)

    ref = hfm_reference(x, rgb, w1, b1, w2, b2)

    # Primary: fully fused single-kernel path (small problem fits VMEM).
    # Tolerance covers MXU multi-pass f32 precision of the in-kernel MLP vs
    # the "highest"-precision XLA reference.
    out = jax.block_until_ready(hfm_forward(x, rgb, w1, b1, w2, b2))
    assert out.shape == (B, C, H, W)
    assert jnp.allclose(out, ref, atol=2e-3, rtol=2e-3), "fused path mismatch"

    # Secondary: force the large-tensor streaming path on the same data.
    out2 = jax.block_until_ready(
        hfm_forward(x, rgb, w1, b1, w2, b2, force_two_pass=True))
    assert jnp.allclose(out2, ref, atol=1e-5, rtol=1e-5), "two-pass path mismatch"

    # Tertiary: BC < 8 exercises the sublane fold in the streaming path.
    xs, rs = x[:1, :3], rgb[:1, :3]
    w1s, w2s, b2s = w1[:3], w2[:, :3], b2[:3]
    refs = hfm_reference(xs, rs, w1s, b1, w2s, b2s)
    outs = jax.block_until_ready(
        hfm_forward(xs, rs, w1s, b1, w2s, b2s, force_two_pass=True))
    assert jnp.allclose(outs, refs, atol=1e-5, rtol=1e-5), "folded path mismatch"

    print("KERNEL_OK")
</pallas_src>

<mosaic_0001>
module attributes {stable_mosaic.version = 11 : i64} {
  func.func @_fused_hfm_kernel(%arg0: i32, %arg1: memref<8x256xf32, #tpu.memory_space<vmem>>, %arg2: memref<8x256xf32, #tpu.memory_space<vmem>>, %arg3: memref<256x8xf32, #tpu.memory_space<vmem>>, %arg4: memref<256x1xf32, #tpu.memory_space<vmem>>, %arg5: memref<8x256xf32, #tpu.memory_space<vmem>>, %arg6: memref<8x1xf32, #tpu.memory_space<vmem>>, %arg7: memref<8x256xf32, #tpu.memory_space<vmem>>) attributes {dimension_semantics = [#tpu.dimension_semantics<arbitrary>], iteration_bounds = array<i64: 1>, scalar_prefetch = 0 : i64, scratch_operands = 0 : i64, tpu.core_type = #tpu.core_type<tc>, window_params = [{pipeline_mode = #tpu.pipeline_mode<synchronous>, transform_indices = @transform_0, window_bounds = array<i64: 8, 256>}, {pipeline_mode = #tpu.pipeline_mode<synchronous>, transform_indices = @transform_1, window_bounds = array<i64: 8, 256>}, {pipeline_mode = #tpu.pipeline_mode<synchronous>, transform_indices = @transform_2, window_bounds = array<i64: 256, 8>}, {pipeline_mode = #tpu.pipeline_mode<synchronous>, transform_indices = @transform_3, window_bounds = array<i64: 256, 1>}, {pipeline_mode = #tpu.pipeline_mode<synchronous>, transform_indices = @transform_4, window_bounds = array<i64: 8, 256>}, {pipeline_mode = #tpu.pipeline_mode<synchronous>, transform_indices = @transform_5, window_bounds = array<i64: 8, 1>}, {pipeline_mode = #tpu.pipeline_mode<synchronous>, transform_indices = @transform_6, window_bounds = array<i64: 8, 256>}]} {
    %c0 = arith.constant 0 : index
    %c0_0 = arith.constant 0 : index
    %0 = vector.load %arg2[%c0, %c0_0] : memref<8x256xf32, #tpu.memory_space<vmem>>, vector<8x256xf32>
    %cst = arith.constant dense<0.000000e+00> : vector<8xf32>
    %1 = vector.multi_reduction <add>, %0, %cst [1] : vector<8x256xf32> to vector<8xf32>
    %2 = vector.shape_cast %1 : vector<8xf32> to vector<8x1xf32>
    %cst_1 = arith.constant 3.906250e-03 : f32
    %3 = vector.broadcast %cst_1 : f32 to vector<8x1xf32>
    %4 = arith.mulf %2, %3 : vector<8x1xf32>
    %c0_2 = arith.constant 0 : index
    %c0_3 = arith.constant 0 : index
    %5 = vector.load %arg3[%c0_2, %c0_3] : memref<256x8xf32, #tpu.memory_space<vmem>>, vector<256x8xf32>
    %cst_4 = arith.constant dense<0.000000e+00> : vector<256x1xf32>
    %6 = tpu.matmul %5, %4, %cst_4 {dimension_numbers = #tpu.dot_dimension_numbers<[1], [0], [0], [1], [0, 0, 1, 1], [], []>} : vector<256x8xf32>, vector<8x1xf32>, vector<256x1xf32> -> vector<256x1xf32>
    %c0_5 = arith.constant 0 : index
    %c0_6 = arith.constant 0 : index
    %7 = vector.load %arg4[%c0_5, %c0_6] : memref<256x1xf32, #tpu.memory_space<vmem>>, vector<256x1xf32>
    %8 = arith.addf %6, %7 : vector<256x1xf32>
    %cst_7 = arith.constant 0.000000e+00 : f32
    %9 = vector.broadcast %cst_7 : f32 to vector<256x1xf32>
    %10 = arith.maximumf %8, %9 : vector<256x1xf32>
    %c0_8 = arith.constant 0 : index
    %c0_9 = arith.constant 0 : index
    %11 = vector.load %arg5[%c0_8, %c0_9] : memref<8x256xf32, #tpu.memory_space<vmem>>, vector<8x256xf32>
    %cst_10 = arith.constant dense<0.000000e+00> : vector<8x1xf32>
    %12 = tpu.matmul %11, %10, %cst_10 {dimension_numbers = #tpu.dot_dimension_numbers<[1], [0], [0], [1], [0, 0, 1, 1], [], []>} : vector<8x256xf32>, vector<256x1xf32>, vector<8x1xf32> -> vector<8x1xf32>
    %c0_11 = arith.constant 0 : index
    %c0_12 = arith.constant 0 : index
    %13 = vector.load %arg6[%c0_11, %c0_12] : memref<8x1xf32, #tpu.memory_space<vmem>>, vector<8x1xf32>
    %14 = arith.addf %12, %13 : vector<8x1xf32>
    %cst_13 = arith.constant 0.000000e+00 : f32
    %15 = vector.broadcast %cst_13 : f32 to vector<8x1xf32>
    %16 = arith.subf %15, %14 : vector<8x1xf32>
    %17 = math.exp %16 : vector<8x1xf32>
    %cst_14 = arith.constant 1.000000e+00 : f32
    %18 = vector.broadcast %cst_14 : f32 to vector<8x1xf32>
    %19 = arith.addf %18, %17 : vector<8x1xf32>
    %cst_15 = arith.constant 1.000000e+00 : f32
    %20 = vector.broadcast %cst_15 : f32 to vector<8x1xf32>
    %21 = arith.divf %20, %19 : vector<8x1xf32>
    %c0_16 = arith.constant 0 : index
    %c0_17 = arith.constant 0 : index
    %22 = vector.load %arg1[%c0_16, %c0_17] : memref<8x256xf32, #tpu.memory_space<vmem>>, vector<8x256xf32>
    %23 = vector.broadcast %21 : vector<8x1xf32> to vector<8x256xf32>
    %24 = arith.mulf %22, %23 : vector<8x256xf32>
    %25 = arith.addf %24, %0 : vector<8x256xf32>
    %c0_18 = arith.constant 0 : index
    %c0_19 = arith.constant 0 : index
    %26 = vector.load %arg7[%c0_18, %c0_19] : memref<8x256xf32, #tpu.memory_space<vmem>>, vector<8x256xf32>
    tpu.vector_store %arg7[%c0_18, %c0_19], %25 {strides = array<i32>} : memref<8x256xf32, #tpu.memory_space<vmem>>, vector<8x256xf32>,
    return
  }
  func.func @transform_0(%arg0: i32) -> (i32, i32) {
    %c0_i32 = arith.constant 0 : i32
    %c0_i32_0 = arith.constant 0 : i32
    %c0_i32_1 = arith.constant 0 : i32
    return %c0_i32, %c0_i32_0 : i32, i32
  }
  func.func @transform_1(%arg0: i32) -> (i32, i32) {
    %c0_i32 = arith.constant 0 : i32
    %c0_i32_0 = arith.constant 0 : i32
    %c0_i32_1 = arith.constant 0 : i32
    return %c0_i32, %c0_i32_0 : i32, i32
  }
  func.func @transform_2(%arg0: i32) -> (i32, i32) {
    %c0_i32 = arith.constant 0 : i32
    %c0_i32_0 = arith.constant 0 : i32
    %c0_i32_1 = arith.constant 0 : i32
    return %c0_i32, %c0_i32_0 : i32, i32
  }
  func.func @transform_3(%arg0: i32) -> (i32, i32) {
    %c0_i32 = arith.constant 0 : i32
    %c0_i32_0 = arith.constant 0 : i32
    %c0_i32_1 = arith.constant 0 : i32
    return %c0_i32, %c0_i32_0 : i32, i32
  }
  func.func @transform_4(%arg0: i32) -> (i32, i32) {
    %c0_i32 = arith.constant 0 : i32
    %c0_i32_0 = arith.constant 0 : i32
    %c0_i32_1 = arith.constant 0 : i32
    return %c0_i32, %c0_i32_0 : i32, i32
  }
  func.func @transform_5(%arg0: i32) -> (i32, i32) {
    %c0_i32 = arith.constant 0 : i32
    %c0_i32_0 = arith.constant 0 : i32
    %c0_i32_1 = arith.constant 0 : i32
    return %c0_i32, %c0_i32_0 : i32, i32
  }
  func.func @transform_6(%arg0: i32) -> (i32, i32) {
    %c0_i32 = arith.constant 0 : i32
    %c0_i32_0 = arith.constant 0 : i32
    %c0_i32_1 = arith.constant 0 : i32
    return %c0_i32, %c0_i32_0 : i32, i32
  }
}

</mosaic_0001>

<llo_original>
// kernel: tpu_custom_call.1
$region0: #{tpu_custom_call.1}
  #allocation0 [shape = 'u32[]', space=smem, size = 0x4, offset = 0x4, fixed_abs, tag = 'smem constant byte address 0x4 - core index']
  #allocation1 [shape = 'u32[144,128]{1,0:T(1,128)}', space=vmem, size = 0x12000, scoped, tag = 'internal scratch']
  %s0 = inlined_call_operand.vmem [shape: f32[8,256], index: 0, kind: input, shape index: {}]
  %s1 = inlined_call_operand.vmem [shape: f32[8,256], index: 1, kind: input, shape index: {}]
  %s2 = inlined_call_operand.vmem [shape: f32[256,8], index: 2, kind: input, shape index: {}]
  %s3 = inlined_call_operand.vmem [shape: f32[256,1], index: 3, kind: input, shape index: {}]
  %s4 = inlined_call_operand.vmem [shape: f32[8,256], index: 4, kind: input, shape index: {}]
  %s5 = inlined_call_operand.vmem [shape: f32[8,1], index: 5, kind: input, shape index: {}]
  %s6 = inlined_call_operand.hbm [shape: f32[8,256], index: 6, kind: output, shape index: {}]
  %s7 = sld [smem:[#allocation0]]
  $region34: #{tpu_custom_call.1} parent=0
    _
  %s9 = ssub.s32 1, %s7
  %s10 = scalar_select 0, %s9, %s7
  $region1: #{tpu_custom_call.1} parent=0
    #allocation2 [shape = 'u8[8192]{0}', space=vmem, size = 0x2000, scoped, tag = 'output window, operand 0, single buffered']
    #allocation3 [shape = 's32[1]{0}', space=sflag, size = 0x4, scoped, tag = 'scoped memory for tpu_custom_call.1']
    %11 = vsyncpa [#allocation3], 0
    // Predicated region
    $region2: #{tpu_custom_call.1} parent=1 // pred_check
      _
    $region3: #{tpu_custom_call.1} parent=1 // pred_check_branch
      %13 = sbr.rel (0) target = $region5
    $region4: #{tpu_custom_call.1} parent=1 // pred_region
      _
    $region5: #{tpu_custom_call.1} parent=1 // pred_fallthru
      _
    // Predicated region
    $region6: #{tpu_custom_call.1} parent=1 // pred_check
      _
    $region7: #{tpu_custom_call.1} parent=1 // pred_check_branch
      %15 = sbr.rel (0) target = $region9
    $region8: #{tpu_custom_call.1} parent=1 // pred_region
      _
    $region9: #{tpu_custom_call.1} parent=1 // pred_fallthru
      _
    // Predicated region
    $region10: #{tpu_custom_call.1} parent=1 // pred_check
      _
    $region11: #{tpu_custom_call.1} parent=1 // pred_check_branch
      %17 = sbr.rel (0) target = $region13
    $region12: #{tpu_custom_call.1} parent=1 // pred_region
      _
    $region13: #{tpu_custom_call.1} parent=1 // pred_fallthru
      _
    // Predicated region
    $region14: #{tpu_custom_call.1} parent=1 // pred_check
      _
    $region15: #{tpu_custom_call.1} parent=1 // pred_check_branch
      %19 = sbr.rel (0) target = $region17
    $region16: #{tpu_custom_call.1} parent=1 // pred_region
      _
    $region17: #{tpu_custom_call.1} parent=1 // pred_fallthru
      _
    // Predicated region
    $region18: #{tpu_custom_call.1} parent=1 // pred_check
      _
    $region19: #{tpu_custom_call.1} parent=1 // pred_check_branch
      %21 = sbr.rel (0) target = $region21
    $region20: #{tpu_custom_call.1} parent=1 // pred_region
      _
    $region21: #{tpu_custom_call.1} parent=1 // pred_fallthru
      _
    // Predicated region
    $region22: #{tpu_custom_call.1} parent=1 // pred_check
      _
    $region23: #{tpu_custom_call.1} parent=1 // pred_check_branch
      %23 = sbr.rel (0) target = $region25
    $region24: #{tpu_custom_call.1} parent=1 // pred_region
      _
    $region25: #{tpu_custom_call.1} parent=1 // pred_fallthru
      _
    %v24 = vld [vmem:[%s1] sm:$0xff]
    %v25 = vld [vmem:[%s1 + $0x8] sm:$0xff]
    %v26 = vadd.f32 %v24, %v25
    %27 = vadd.xlane.f32.xlu0 %v26
    %v28 = vpop.xlane.xlu0 %27
    %v29 = vmul.f32 %v28, 0.00390625
    %v30 = vld [vmem:[%s2] sm:$0xff]
    %v31 = vld [vmem:[%s2 + $0x8] sm:$0xff]
    %v32 = vld [vmem:[%s2 + $0x10] sm:$0xff]
    %v33 = vld [vmem:[%s2 + $0x18] sm:$0xff]
    %v34 = vld [vmem:[%s2 + $0x20] sm:$0xff]
    %v35 = vld [vmem:[%s2 + $0x28] sm:$0xff]
    %v36 = vld [vmem:[%s2 + $0x30] sm:$0xff]
    %v37 = vld [vmem:[%s2 + $0x38] sm:$0xff]
    %v38 = vld [vmem:[%s2 + $0x40] sm:$0xff]
    %v39 = vld [vmem:[%s2 + $0x48] sm:$0xff]
    %v40 = vld [vmem:[%s2 + $0x50] sm:$0xff]
    %v41 = vld [vmem:[%s2 + $0x58] sm:$0xff]
    %v42 = vld [vmem:[%s2 + $0x60] sm:$0xff]
    %v43 = vld [vmem:[%s2 + $0x68] sm:$0xff]
    %v44 = vld [vmem:[%s2 + $0x70] sm:$0xff]
    %v45 = vld [vmem:[%s2 + $0x78] sm:$0xff]
    %v46 = vld [vmem:[%s2 + $0x80] sm:$0xff]
    %v47 = vld [vmem:[%s2 + $0x88] sm:$0xff]
    %v48 = vld [vmem:[%s2 + $0x90] sm:$0xff]
    %v49 = vld [vmem:[%s2 + $0x98] sm:$0xff]
    %v50 = vld [vmem:[%s2 + $0xa0] sm:$0xff]
    %v51 = vld [vmem:[%s2 + $0xa8] sm:$0xff]
    %v52 = vld [vmem:[%s2 + $0xb0] sm:$0xff]
    %v53 = vld [vmem:[%s2 + $0xb8] sm:$0xff]
    %v54 = vld [vmem:[%s2 + $0xc0] sm:$0xff]
    %v55 = vld [vmem:[%s2 + $0xc8] sm:$0xff]
    %v56 = vld [vmem:[%s2 + $0xd0] sm:$0xff]
    %v57 = vld [vmem:[%s2 + $0xd8] sm:$0xff]
    %v58 = vld [vmem:[%s2 + $0xe0] sm:$0xff]
    %v59 = vld [vmem:[%s2 + $0xe8] sm:$0xff]
    %v60 = vld [vmem:[%s2 + $0xf0] sm:$0xff]
    %v61 = vld [vmem:[%s2 + $0xf8] sm:$0xff]
    %v62 = vld [vmem:[%s3] sm:$0xff]
    %v63 = vld [vmem:[%s3 + $0x8] sm:$0xff]
    %v64 = vld [vmem:[%s3 + $0x10] sm:$0xff]
    %v65 = vld [vmem:[%s3 + $0x18] sm:$0xff]
    %v66 = vld [vmem:[%s3 + $0x20] sm:$0xff]
    %v67 = vld [vmem:[%s3 + $0x28] sm:$0xff]
    %v68 = vld [vmem:[%s3 + $0x30] sm:$0xff]
    %v69 = vld [vmem:[%s3 + $0x38] sm:$0xff]
    %v70 = vld [vmem:[%s3 + $0x40] sm:$0xff]
    %v71 = vld [vmem:[%s3 + $0x48] sm:$0xff]
    %v72 = vld [vmem:[%s3 + $0x50] sm:$0xff]
    %v73 = vld [vmem:[%s3 + $0x58] sm:$0xff]
    %v74 = vld [vmem:[%s3 + $0x60] sm:$0xff]
    %v75 = vld [vmem:[%s3 + $0x68] sm:$0xff]
    %v76 = vld [vmem:[%s3 + $0x70] sm:$0xff]
    %v77 = vld [vmem:[%s3 + $0x78] sm:$0xff]
    %v78 = vld [vmem:[%s3 + $0x80] sm:$0xff]
    %v79 = vld [vmem:[%s3 + $0x88] sm:$0xff]
    %v80 = vld [vmem:[%s3 + $0x90] sm:$0xff]
    %v81 = vld [vmem:[%s3 + $0x98] sm:$0xff]
    %v82 = vld [vmem:[%s3 + $0xa0] sm:$0xff]
    %v83 = vld [vmem:[%s3 + $0xa8] sm:$0xff]
    %v84 = vld [vmem:[%s3 + $0xb0] sm:$0xff]
    %v85 = vld [vmem:[%s3 + $0xb8] sm:$0xff]
    %v86 = vld [vmem:[%s3 + $0xc0] sm:$0xff]
    %v87 = vld [vmem:[%s3 + $0xc8] sm:$0xff]
    %v88 = vld [vmem:[%s3 + $0xd0] sm:$0xff]
    %v89 = vld [vmem:[%s3 + $0xd8] sm:$0xff]
    %v90 = vld [vmem:[%s3 + $0xe0] sm:$0xff]
    %v91 = vld [vmem:[%s3 + $0xe8] sm:$0xff]
    %v92 = vld [vmem:[%s3 + $0xf0] sm:$0xff]
    %v93 = vld [vmem:[%s3 + $0xf8] sm:$0xff]
    %vm94 = vcmask 64512
    %v96 = vsel %vm94, %v30, 0
    %v99 = vsel %vm94, %v31, 0
    %v102 = vsel %vm94, %v32, 0
    %v105 = vsel %vm94, %v33, 0
    %v108 = vsel %vm94, %v34, 0
    %v111 = vsel %vm94, %v35, 0
    %v114 = vsel %vm94, %v36, 0
    %v117 = vsel %vm94, %v37, 0
    %v120 = vsel %vm94, %v38, 0
    %v123 = vsel %vm94, %v39, 0
    %v126 = vsel %vm94, %v40, 0
    %v129 = vsel %vm94, %v41, 0
    %v132 = vsel %vm94, %v42, 0
    %v135 = vsel %vm94, %v43, 0
    %v138 = vsel %vm94, %v44, 0
    %v141 = vsel %vm94, %v45, 0
    %v144 = vsel %vm94, %v46, 0
    %v147 = vsel %vm94, %v47, 0
    %v150 = vsel %vm94, %v48, 0
    %v153 = vsel %vm94, %v49, 0
    %v156 = vsel %vm94, %v50, 0
    %v159 = vsel %vm94, %v51, 0
    %v162 = vsel %vm94, %v52, 0
    %v165 = vsel %vm94, %v53, 0
    %v168 = vsel %vm94, %v54, 0
    %v171 = vsel %vm94, %v55, 0
    %v174 = vsel %vm94, %v56, 0
    %v177 = vsel %vm94, %v57, 0
    %v180 = vsel %vm94, %v58, 0
    %v183 = vsel %vm94, %v59, 0
    %v186 = vsel %vm94, %v60, 0
    %v189 = vsel %vm94, %v61, 0
    %191 = vmatprep.subr.mxu0 0.0
    %192 = vmatpush1.msra.mxu0 0.0
    %193 = vmatprep.subr.mxu0 0.0
    %194 = vmatpush1.msra.mxu0 0.0
    %195 = vmatprep.subr.mxu0 0.0
    %196 = vmatpush1.msra.mxu0 0.0
    %197 = vmatprep.subr.mxu0 0.0
    %198 = vmatpush1.msra.mxu0 0.0
    %199 = vmatprep.subr.mxu0 0.0
    %200 = vmatpush1.msra.mxu0 0.0
    %201 = vmatprep.subr.mxu0 0.0
    %202 = vmatpush1.msra.mxu0 0.0
    %203 = vmatprep.subr.mxu0 0.0
    %204 = vmatpush1.msra.mxu0 0.0
    %205 = vmatprep.subr.mxu0 0.0
    %206 = vmatpush1.msra.mxu0 0.0
    %207 = vmatprep.subr.mxu0 0.0
    %208 = vmatpush1.msra.mxu0 0.0
    %209 = vmatprep.subr.mxu0 0.0
    %210 = vmatpush1.msra.mxu0 0.0
    %211 = vmatprep.subr.mxu0 0.0
    %212 = vmatpush1.msra.mxu0 0.0
    %213 = vmatprep.subr.mxu0 0.0
    %214 = vmatpush1.msra.mxu0 0.0
    %215 = vmatprep.subr.mxu0 0.0
    %216 = vmatpush1.msra.mxu0 0.0
    %217 = vmatprep.subr.mxu0 0.0
    %218 = vmatpush1.msra.mxu0 0.0
    %219 = vmatprep.subr.mxu0 0.0
    %220 = vmatpush1.msra.mxu0 0.0
    %221 = vmatprep.subr.mxu0 0.0
    %222 = vmatpush1.msra.mxu0 %v29
    %223 = vmatprep.subr.mxu0 0.0
    %224 = vmatpush2.msra.mxu0 0.0
    %225 = vmatprep.subr.mxu0 0.0
    %226 = vmatpush2.msra.mxu0 0.0
    %227 = vmatprep.subr.mxu0 0.0
    %228 = vmatpush2.msra.mxu0 0.0
    %229 = vmatprep.subr.mxu0 0.0
    %230 = vmatpush2.msra.mxu0 0.0
    %231 = vmatprep.subr.mxu0 0.0
    %232 = vmatpush2.msra.mxu0 0.0
    %233 = vmatprep.subr.mxu0 0.0
    %234 = vmatpush2.msra.mxu0 0.0
    %235 = vmatprep.subr.mxu0 0.0
    %236 = vmatpush2.msra.mxu0 0.0
    %237 = vmatprep.subr.mxu0 0.0
    %238 = vmatpush2.msra.mxu0 0.0
    %239 = vmatprep.subr.mxu0 0.0
    %240 = vmatpush2.msra.mxu0 0.0
    %241 = vmatprep.subr.mxu0 0.0
    %242 = vmatpush2.msra.mxu0 0.0
    %243 = vmatprep.subr.mxu0 0.0
    %244 = vmatpush2.msra.mxu0 0.0
    %245 = vmatprep.subr.mxu0 0.0
    %246 = vmatpush2.msra.mxu0 0.0
    %247 = vmatprep.subr.mxu0 0.0
    %248 = vmatpush2.msra.mxu0 0.0
    %249 = vmatprep.subr.mxu0 0.0
    %250 = vmatpush2.msra.mxu0 0.0
    %251 = vmatprep.subr.mxu0 0.0
    %252 = vmatpush2.msra.mxu0 0.0
    %253 = vmatprep.subr.mxu0 0.0
    %254 = vmatpush2.msra.mxu0 0.0
    %255 = vmatprep.mubr.f32.mxu0 0.0
    %256 = vmatmul.mubr.f32.gmra.mxu0 %v96
    %v257 = vpop.f32.mrf.mxu0
    %v258 = vadd.f32 %v62, %v257
    %v259 = vpop.f32.mrf.mxu0
    %260 = vmatprep.mubr.f32.mxu0 0.0
    %261 = vmatmul.mubr.f32.gmra.mxu0 %v99
    %v262 = vpop.f32.mrf.mxu0
    %v263 = vadd.f32 %v63, %v262
    %v264 = vpop.f32.mrf.mxu0
    %265 = vmatprep.mubr.f32.mxu0 0.0
    %266 = vmatmul.mubr.f32.gmra.mxu0 %v102
    %v267 = vpop.f32.mrf.mxu0
    %v268 = vadd.f32 %v64, %v267
    %v269 = vpop.f32.mrf.mxu0
    %270 = vmatprep.mubr.f32.mxu0 0.0
    %271 = vmatmul.mubr.f32.gmra.mxu0 %v105
    %v272 = vpop.f32.mrf.mxu0
    %v273 = vadd.f32 %v65, %v272
    %v274 = vpop.f32.mrf.mxu0
    %275 = vmatprep.mubr.f32.mxu0 0.0
    %276 = vmatmul.mubr.f32.gmra.mxu0 %v108
    %v277 = vpop.f32.mrf.mxu0
    %v278 = vadd.f32 %v66, %v277
    %v279 = vpop.f32.mrf.mxu0
    %280 = vmatprep.mubr.f32.mxu0 0.0
    %281 = vmatmul.mubr.f32.gmra.mxu0 %v111
    %v282 = vpop.f32.mrf.mxu0
    %v283 = vadd.f32 %v67, %v282
    %v284 = vpop.f32.mrf.mxu0
    %285 = vmatprep.mubr.f32.mxu0 0.0
    %286 = vmatmul.mubr.f32.gmra.mxu0 %v114
    %v287 = vpop.f32.mrf.mxu0
    %v288 = vadd.f32 %v68, %v287
    %v289 = vpop.f32.mrf.mxu0
    %290 = vmatprep.mubr.f32.mxu0 0.0
    %291 = vmatmul.mubr.f32.gmra.mxu0 %v117
    %v292 = vpop.f32.mrf.mxu0
    %v293 = vadd.f32 %v69, %v292
    %v294 = vpop.f32.mrf.mxu0
    %295 = vmatprep.mubr.f32.mxu0 0.0
    %296 = vmatmul.mubr.f32.gmra.mxu0 %v120
    %v297 = vpop.f32.mrf.mxu0
    %v298 = vadd.f32 %v70, %v297
    %v299 = vpop.f32.mrf.mxu0
    %300 = vmatprep.mubr.f32.mxu0 0.0
    %301 = vmatmul.mubr.f32.gmra.mxu0 %v123
    %v302 = vpop.f32.mrf.mxu0
    %v303 = vadd.f32 %v71, %v302
    %v304 = vpop.f32.mrf.mxu0
    %305 = vmatprep.mubr.f32.mxu0 0.0
    %306 = vmatmul.mubr.f32.gmra.mxu0 %v126
    %v307 = vpop.f32.mrf.mxu0
    %v308 = vadd.f32 %v72, %v307
    %v309 = vpop.f32.mrf.mxu0
    %310 = vmatprep.mubr.f32.mxu0 0.0
    %311 = vmatmul.mubr.f32.gmra.mxu0 %v129
    %v312 = vpop.f32.mrf.mxu0
    %v313 = vadd.f32 %v73, %v312
    %v314 = vpop.f32.mrf.mxu0
    %315 = vmatprep.mubr.f32.mxu0 0.0
    %316 = vmatmul.mubr.f32.gmra.mxu0 %v132
    %v317 = vpop.f32.mrf.mxu0
    %v318 = vadd.f32 %v74, %v317
    %v319 = vpop.f32.mrf.mxu0
    %320 = vmatprep.mubr.f32.mxu0 0.0
    %321 = vmatmul.mubr.f32.gmra.mxu0 %v135
    %v322 = vpop.f32.mrf.mxu0
    %v323 = vadd.f32 %v75, %v322
    %v324 = vpop.f32.mrf.mxu0
    %325 = vmatprep.mubr.f32.mxu0 0.0
    %326 = vmatmul.mubr.f32.gmra.mxu0 %v138
    %v327 = vpop.f32.mrf.mxu0
    %v328 = vadd.f32 %v76, %v327
    %v329 = vpop.f32.mrf.mxu0
    %330 = vmatprep.mubr.f32.mxu0 0.0
    %331 = vmatmul.mubr.f32.gmra.mxu0 %v141
    %v332 = vpop.f32.mrf.mxu0
    %v333 = vadd.f32 %v77, %v332
    %v334 = vpop.f32.mrf.mxu0
    %335 = vmatprep.mubr.f32.mxu0 0.0
    %336 = vmatmul.mubr.f32.gmra.mxu0 %v144
    %v337 = vpop.f32.mrf.mxu0
    %v338 = vadd.f32 %v78, %v337
    %v339 = vpop.f32.mrf.mxu0
    %340 = vmatprep.mubr.f32.mxu0 0.0
    %341 = vmatmul.mubr.f32.gmra.mxu0 %v147
    %v342 = vpop.f32.mrf.mxu0
    %v343 = vadd.f32 %v79, %v342
    %v344 = vpop.f32.mrf.mxu0
    %345 = vmatprep.mubr.f32.mxu0 0.0
    %346 = vmatmul.mubr.f32.gmra.mxu0 %v150
    %v347 = vpop.f32.mrf.mxu0
    %v348 = vadd.f32 %v80, %v347
    %v349 = vpop.f32.mrf.mxu0
    %350 = vmatprep.mubr.f32.mxu0 0.0
    %351 = vmatmul.mubr.f32.gmra.mxu0 %v153
    %v352 = vpop.f32.mrf.mxu0
    %v353 = vadd.f32 %v81, %v352
    %v354 = vpop.f32.mrf.mxu0
    %355 = vmatprep.mubr.f32.mxu0 0.0
    %356 = vmatmul.mubr.f32.gmra.mxu0 %v156
    %v357 = vpop.f32.mrf.mxu0
    %v358 = vadd.f32 %v82, %v357
    %v359 = vpop.f32.mrf.mxu0
    %360 = vmatprep.mubr.f32.mxu0 0.0
    %361 = vmatmul.mubr.f32.gmra.mxu0 %v159
    %v362 = vpop.f32.mrf.mxu0
    %v363 = vadd.f32 %v83, %v362
    %v364 = vpop.f32.mrf.mxu0
    %365 = vmatprep.mubr.f32.mxu0 0.0
    %366 = vmatmul.mubr.f32.gmra.mxu0 %v162
    %v367 = vpop.f32.mrf.mxu0
    %v368 = vadd.f32 %v84, %v367
    %v369 = vpop.f32.mrf.mxu0
    %370 = vmatprep.mubr.f32.mxu0 0.0
    %371 = vmatmul.mubr.f32.gmra.mxu0 %v165
    %v372 = vpop.f32.mrf.mxu0
    %v373 = vadd.f32 %v85, %v372
    %v374 = vpop.f32.mrf.mxu0
    %375 = vmatprep.mubr.f32.mxu0 0.0
    %376 = vmatmul.mubr.f32.gmra.mxu0 %v168
    %v377 = vpop.f32.mrf.mxu0
    %v378 = vadd.f32 %v86, %v377
    %v379 = vpop.f32.mrf.mxu0
    %380 = vmatprep.mubr.f32.mxu0 0.0
    %381 = vmatmul.mubr.f32.gmra.mxu0 %v171
    %v382 = vpop.f32.mrf.mxu0
    %v383 = vadd.f32 %v87, %v382
    %v384 = vpop.f32.mrf.mxu0
    %385 = vmatprep.mubr.f32.mxu0 0.0
    %386 = vmatmul.mubr.f32.gmra.mxu0 %v174
    %v387 = vpop.f32.mrf.mxu0
    %v388 = vadd.f32 %v88, %v387
    %v389 = vpop.f32.mrf.mxu0
    %390 = vmatprep.mubr.f32.mxu0 0.0
    %391 = vmatmul.mubr.f32.gmra.mxu0 %v177
    %v392 = vpop.f32.mrf.mxu0
    %v393 = vadd.f32 %v89, %v392
    %v394 = vpop.f32.mrf.mxu0
    %395 = vmatprep.mubr.f32.mxu0 0.0
    %396 = vmatmul.mubr.f32.gmra.mxu0 %v180
    %v397 = vpop.f32.mrf.mxu0
    %v398 = vadd.f32 %v90, %v397
    %v399 = vpop.f32.mrf.mxu0
    %400 = vmatprep.mubr.f32.mxu0 0.0
    %401 = vmatmul.mubr.f32.gmra.mxu0 %v183
    %v402 = vpop.f32.mrf.mxu0
    %v403 = vadd.f32 %v91, %v402
    %v404 = vpop.f32.mrf.mxu0
    %405 = vmatprep.mubr.f32.mxu0 0.0
    %406 = vmatmul.mubr.f32.gmra.mxu0 %v186
    %v407 = vpop.f32.mrf.mxu0
    %v408 = vadd.f32 %v92, %v407
    %v409 = vpop.f32.mrf.mxu0
    %410 = vmatprep.mubr.f32.mxu0 0.0
    %411 = vmatmul.mubr.f32.gmra.mxu0 %v189
    %v412 = vpop.f32.mrf.mxu0
    %v413 = vadd.f32 %v93, %v412
    %v414 = vpop.f32.mrf.mxu0
    %415 = vdwg.mxu0
    %v416 = vmax.f32 %v258, 0.0
    %v417 = vmax.f32 %v263, 0.0
    %v418 = vmax.f32 %v268, 0.0
    %v419 = vmax.f32 %v273, 0.0
    %v420 = vmax.f32 %v278, 0.0
    %v421 = vmax.f32 %v283, 0.0
    %v422 = vmax.f32 %v288, 0.0
    %v423 = vmax.f32 %v293, 0.0
    %v424 = vmax.f32 %v298, 0.0
    %v425 = vmax.f32 %v303, 0.0
    %v426 = vmax.f32 %v308, 0.0
    %v427 = vmax.f32 %v313, 0.0
    %v428 = vmax.f32 %v318, 0.0
    %v429 = vmax.f32 %v323, 0.0
    %v430 = vmax.f32 %v328, 0.0
    %v431 = vmax.f32 %v333, 0.0
    %v432 = vmax.f32 %v338, 0.0
    %v433 = vmax.f32 %v343, 0.0
    %v434 = vmax.f32 %v348, 0.0
    %v435 = vmax.f32 %v353, 0.0
    %v436 = vmax.f32 %v358, 0.0
    %v437 = vmax.f32 %v363, 0.0
    %v438 = vmax.f32 %v368, 0.0
    %v439 = vmax.f32 %v373, 0.0
    %v440 = vmax.f32 %v378, 0.0
    %v441 = vmax.f32 %v383, 0.0
    %v442 = vmax.f32 %v388, 0.0
    %v443 = vmax.f32 %v393, 0.0
    %v444 = vmax.f32 %v398, 0.0
    %v445 = vmax.f32 %v403, 0.0
    %v446 = vmax.f32 %v408, 0.0
    %v447 = vmax.f32 %v413, 0.0
    %v448 = vld [vmem:[%s4] sm:$0xff]
    %v449 = vld [vmem:[%s4 + $0x8] sm:$0xff]
    %v450 = vld [vmem:[%s5] sm:$0xff]
    %451 = vmatprep.subr.mxu0 0.0
    %452 = vmatpush1.msra.mxu0 %v431
    %453 = vmatprep.subr.mxu0 0.0
    %454 = vmatpush1.msra.mxu0 %v430
    %455 = vmatprep.subr.mxu0 0.0
    %456 = vmatpush1.msra.mxu0 %v429
    %457 = vmatprep.subr.mxu0 0.0
    %458 = vmatpush1.msra.mxu0 %v428
    %459 = vmatprep.subr.mxu0 0.0
    %460 = vmatpush1.msra.mxu0 %v427
    %461 = vmatprep.subr.mxu0 0.0
    %462 = vmatpush1.msra.mxu0 %v426
    %463 = vmatprep.subr.mxu0 0.0
    %464 = vmatpush1.msra.mxu0 %v425
    %465 = vmatprep.subr.mxu0 0.0
    %466 = vmatpush1.msra.mxu0 %v424
    %467 = vmatprep.subr.mxu0 0.0
    %468 = vmatpush1.msra.mxu0 %v423
    %469 = vmatprep.subr.mxu0 0.0
    %470 = vmatpush1.msra.mxu0 %v422
    %471 = vmatprep.subr.mxu0 0.0
    %472 = vmatpush1.msra.mxu0 %v421
    %473 = vmatprep.subr.mxu0 0.0
    %474 = vmatpush1.msra.mxu0 %v420
    %475 = vmatprep.subr.mxu0 0.0
    %476 = vmatpush1.msra.mxu0 %v419
    %477 = vmatprep.subr.mxu0 0.0
    %478 = vmatpush1.msra.mxu0 %v418
    %479 = vmatprep.subr.mxu0 0.0
    %480 = vmatpush1.msra.mxu0 %v417
    %481 = vmatprep.subr.mxu0 0.0
    %482 = vmatpush1.msra.mxu0 %v416
    %483 = vmatprep.subr.mxu0 0.0
    %484 = vmatpush2.msra.mxu0 %v447
    %485 = vmatprep.subr.mxu0 0.0
    %486 = vmatpush2.msra.mxu0 %v446
    %487 = vmatprep.subr.mxu0 0.0
    %488 = vmatpush2.msra.mxu0 %v445
    %489 = vmatprep.subr.mxu0 0.0
    %490 = vmatpush2.msra.mxu0 %v444
    %491 = vmatprep.subr.mxu0 0.0
    %492 = vmatpush2.msra.mxu0 %v443
    %493 = vmatprep.subr.mxu0 0.0
    %494 = vmatpush2.msra.mxu0 %v442
    %495 = vmatprep.subr.mxu0 0.0
    %496 = vmatpush2.msra.mxu0 %v441
    %497 = vmatprep.subr.mxu0 0.0
    %498 = vmatpush2.msra.mxu0 %v440
    %499 = vmatprep.subr.mxu0 0.0
    %500 = vmatpush2.msra.mxu0 %v439
    %501 = vmatprep.subr.mxu0 0.0
    %502 = vmatpush2.msra.mxu0 %v438
    %503 = vmatprep.subr.mxu0 0.0
    %504 = vmatpush2.msra.mxu0 %v437
    %505 = vmatprep.subr.mxu0 0.0
    %506 = vmatpush2.msra.mxu0 %v436
    %507 = vmatprep.subr.mxu0 0.0
    %508 = vmatpush2.msra.mxu0 %v435
    %509 = vmatprep.subr.mxu0 0.0
    %510 = vmatpush2.msra.mxu0 %v434
    %511 = vmatprep.subr.mxu0 0.0
    %512 = vmatpush2.msra.mxu0 %v433
    %513 = vmatprep.subr.mxu0 0.0
    %514 = vmatpush2.msra.mxu0 %v432
    %515 = vmatprep.mubr.f32.mxu0 %v449
    %516 = vmatmul.mubr.f32.gmra.mxu0 %v448
    %v517 = vpop.f32.mrf.mxu0
    %v518 = vadd.f32 %v450, %v517
    %v519 = vpop.f32.mrf.mxu0
    %520 = vdwg.mxu0
    %v521 = vsub.f32 0.0, %v518
    %v522 = vmul.f32 %v521, 1.442695
    %v523 = vpow.pop %v522
    %v524 = vadd.f32 %v523, 1.0
    %v525 = vrcp.pop %v524
    %v526 = vmul.f32 1.0, %v525
    %v527 = vld [vmem:[%s0] sm:$0xff]
    %v528 = vld [vmem:[%s0 + $0x8] sm:$0xff]
    %530 = vset.pattern.permute.xlu0 0
    %531 = vperm.xlu0 %530, %v526
    %v532 = vpop.permute.xlu0 %531
    %v534 = vmul.f32 %v527, %v532
    %v535 = vmul.f32 %v528, %v532
    %v536 = vadd.f32 %v534, %v24
    %v537 = vadd.f32 %v535, %v25
    %538 = vst [vmem:[#allocation2] sm:$0xff] %v536
    %539 = vst [vmem:[#allocation2 + $0x8] sm:$0xff] %v537
    // Predicated region
    $region26: #{tpu_custom_call.1} parent=1 // pred_check
      _
    $region27: #{tpu_custom_call.1} parent=1 // pred_check_branch
      %541 = sbr.rel (0) target = $region29
    $region28: #{tpu_custom_call.1} parent=1 // pred_region
      %s543 = ssub.s32 256, 256
      %544 = vsyncadd [#allocation3], %s543
      %s546 = sshll.u32 [#allocation2], 4
      %s547 = int_to_ptr.vmem [resolvable:$true] %s546
      %549 = dma.vmem_to_hbm [thread:$0]  %s547, 256, %s6, [#allocation3]
    $region29: #{tpu_custom_call.1} parent=1 // pred_fallthru
      _
    // Predicated region
    $region30: #{tpu_custom_call.1} parent=1 // pred_check
      _
    $region31: #{tpu_custom_call.1} parent=1 // pred_check_branch
      %551 = sbr.rel (0) target = $region33
    $region32: #{tpu_custom_call.1} parent=1 // pred_region
      %552 = dma.done [#allocation3], 256
    $region33: #{tpu_custom_call.1} parent=1 // pred_fallthru
      _
    %553 = vsyncpa [#allocation3], 1

</llo_original>
